<compile_context>
chip_gen: v7x
topology: tpu7x:2x2x1
jax: 0.10.0
libtpu: 0.0.40
codegen_flags: <defaults>
</compile_context>

<pallas_src>
import functools

import jax
import jax.numpy as jnp
from jax.experimental import pallas as pl
from jax.experimental.pallas import tpu as pltpu


# --------------------------------------------------------------------------- #
# Kernel
# --------------------------------------------------------------------------- #
def _fused_mlp_kernel(x_ref, *refs, num_layers):
    """refs = (w0, b0, w1, b1, ..., w_{L-1}, b_{L-1}, o_ref)."""
    o_ref = refs[-1]
    wb = refs[:-1]

    # In-kernel cast: cheap VPU work hidden under the MXU pushes.
    h = x_ref[...].astype(jnp.bfloat16)              # (TM, K_pad) bf16
    for i in range(num_layers):
        w_ref = wb[2 * i]
        b_ref = wb[2 * i + 1]
        # MXU matmul in bf16 with f32 accumulation.
        acc = jnp.dot(h, w_ref[...], preferred_element_type=jnp.float32)
        acc = acc + b_ref[...]                        # (1, N) bias broadcast, f32
        if i < num_layers - 1:
            h = jnp.maximum(acc, 0.0).astype(jnp.bfloat16)
        else:
            o_ref[...] = acc.astype(o_ref.dtype)      # bf16 writeback


# --------------------------------------------------------------------------- #
# Parameter prep (one-time, outside the forward path)
# --------------------------------------------------------------------------- #
def _round_up(v, m):
    return ((v + m - 1) // m) * m


def prepare_mlp_params(params):
    """One-time prep: zero-pad feature dims to multiples of 128, cast W to bf16.

    Padded columns/rows stay exactly 0 through bias-add and ReLU, so the math
    is unchanged.  For real DETR dims (d_model=256) this is a pure no-op copy.
    """
    prepped = []
    for (w, b) in params:
        kin, nout = w.shape
        kin_p, nout_p = _round_up(kin, 128), _round_up(nout, 128)
        w_p = jnp.zeros((kin_p, nout_p), jnp.bfloat16).at[:kin, :nout].set(
            w.astype(jnp.bfloat16))
        b_p = jnp.zeros((1, nout_p), jnp.float32).at[0, :nout].set(
            b.astype(jnp.float32))
        prepped.append((w_p, b_p))
    return prepped


def _choose_tm(m):
    # Largest M tile (better pipelining / HBM roofline) that still leaves at
    # least 2 grid steps so v7x's two TensorCores both get work.
    for tm in (512, 256, 128):
        if m >= 2 * tm:
            return tm
    if m > 8:
        return _round_up(-(-m // 2), 8)   # two sublane-aligned steps
    return 8


# --------------------------------------------------------------------------- #
# Forward
# --------------------------------------------------------------------------- #
def mlp_forward(x, params, output_dim, out_dtype=jnp.bfloat16):
    """Equivalent of MLP.forward: relu(layer(x)) for all but the last layer.

    `params` must be the output of `prepare_mlp_params` (padded, bf16 weights).
    """
    lead = x.shape[:-1]
    x2d = x.reshape(-1, x.shape[-1])
    M, K = x2d.shape
    num_layers = len(params)

    K_pad = params[0][0].shape[0]        # padded input feature dim
    N_pad = params[-1][0].shape[1]       # padded (lane-dense) output feature dim
    if K_pad != K:
        # Only toy dims (<128) pay this; DETR d_model=256 passes through as-is.
        x2d = jnp.pad(x2d, ((0, 0), (0, K_pad - K)))

    TM = _choose_tm(M)
    grid = (pl.cdiv(M, TM),)

    # ---- VMEM budget guard (sized for v7x's 64 MiB physical VMEM) -----------
    resident = sum(int(w.size) * w.dtype.itemsize + int(b.size) * b.dtype.itemsize
                   for (w, b) in params)                     # single-buffered
    max_feat = max(max(w.shape) for (w, _) in params)
    tiles = 2 * TM * K_pad * 4 + 2 * TM * N_pad * 2          # dbl-buffered x / out
    interm = 2 * TM * max_feat * 4                           # f32 temporaries headroom
    vmem_need = resident + tiles + interm
    if vmem_need > 56 * (1 << 20):
        # TODO(synk): fall back to a K-tiled grid axis ("arbitrary") with a VMEM
        # f32 accumulator instead of keeping every layer resident.
        raise ValueError(
            f"MLP needs ~{vmem_need >> 20} MiB of VMEM; exceeds v7x budget.")
    vmem_limit = int(min(max(vmem_need + (8 << 20), 32 << 20), 64 << 20))

    # ---- specs ---------------------------------------------------------------
    flat_inputs = [x2d]
    in_specs = [pl.BlockSpec((TM, K_pad), lambda i: (i, 0))]
    flops = 0
    bytes_accessed = M * K_pad * 4 + resident + M * N_pad * 2
    for (w_p, b_p) in params:
        flat_inputs.extend([w_p, b_p])
        # Grid-invariant blocks: single-buffer them (no point double-buffering
        # a block whose index never changes).
        in_specs.append(pl.BlockSpec(w_p.shape, lambda i: (0, 0),
                                     pipeline_mode=pl.Buffered(1)))
        in_specs.append(pl.BlockSpec(b_p.shape, lambda i: (0, 0),
                                     pipeline_mode=pl.Buffered(1)))
        flops += 2 * M * w_p.shape[0] * w_p.shape[1]

    out = pl.pallas_call(
        functools.partial(_fused_mlp_kernel, num_layers=num_layers),
        out_shape=jax.ShapeDtypeStruct((M, N_pad), out_dtype),
        grid=grid,
        in_specs=in_specs,
        out_specs=pl.BlockSpec((TM, N_pad), lambda i: (i, 0)),
        compiler_params=pltpu.CompilerParams(
            dimension_semantics=("parallel",),
            vmem_limit_bytes=vmem_limit),
        cost_estimate=pl.CostEstimate(
            flops=flops, transcendentals=0, bytes_accessed=bytes_accessed),
    )(*flat_inputs)

    return out[:, :output_dim].reshape(*lead, output_dim)


# --------------------------------------------------------------------------- #
# Init (mirrors nn.Linear's uniform(-1/sqrt(fan_in), 1/sqrt(fan_in)))
# --------------------------------------------------------------------------- #
def init_mlp_params(key, input_dim, hidden_dim, output_dim, num_layers):
    h = [hidden_dim] * (num_layers - 1)
    dims = list(zip([input_dim] + h, h + [output_dim]))
    params = []
    for (n_in, n_out) in dims:
        key, kw, kb = jax.random.split(key, 3)
        bound = 1.0 / (n_in ** 0.5)
        w = jax.random.uniform(kw, (n_in, n_out), jnp.float32, -bound, bound)
        b = jax.random.uniform(kb, (n_out,), jnp.float32, -bound, bound)
        params.append((w, b))
    return params


if __name__ == "__main__":
    key = jax.random.PRNGKey(0)
    batch, seq = 2, 8
    input_dim, hidden_dim, output_dim, num_layers = 32, 32, 4, 3

    kx, kp = jax.random.split(key)
    x = jax.random.normal(kx, (batch, seq, input_dim), jnp.float32)
    params = init_mlp_params(kp, input_dim, hidden_dim, output_dim, num_layers)

    # One-time parameter prep (hoisted out of the forward path).
    prepped = prepare_mlp_params(params)

    mlp_fwd = jax.jit(mlp_forward, static_argnames=("output_dim",))
    out = mlp_fwd(x, prepped, output_dim=output_dim)
    out = jax.block_until_ready(out)

    # Pure-JAX reference with the same bf16-operand / f32-accumulate math.
    ref = x
    for i, (w, b) in enumerate(params):
        ref = jnp.dot(ref.astype(jnp.bfloat16), w.astype(jnp.bfloat16),
                      preferred_element_type=jnp.float32) + b
        if i < num_layers - 1:
            ref = jnp.maximum(ref, 0.0)

    assert out.shape == (batch, seq, output_dim)
    out_f32 = out.astype(jnp.float32)
    assert jnp.allclose(out_f32, ref, atol=2e-2, rtol=2e-2), (
        float(jnp.max(jnp.abs(out_f32 - ref))))

    print("KERNEL_OK")
</pallas_src>

<mosaic_0001>
module attributes {stable_mosaic.version = 11 : i64} {
  func.func @_fused_mlp_kernel(%arg0: i32, %arg1: memref<8x128xf32, #tpu.memory_space<vmem>>, %arg2: memref<128x128xbf16, #tpu.memory_space<vmem>>, %arg3: memref<1x128xf32, #tpu.memory_space<vmem>>, %arg4: memref<128x128xbf16, #tpu.memory_space<vmem>>, %arg5: memref<1x128xf32, #tpu.memory_space<vmem>>, %arg6: memref<128x128xbf16, #tpu.memory_space<vmem>>, %arg7: memref<1x128xf32, #tpu.memory_space<vmem>>, %arg8: memref<8x128xbf16, #tpu.memory_space<vmem>>) attributes {dimension_semantics = [#tpu.dimension_semantics<parallel>], iteration_bounds = array<i64: 2>, scalar_prefetch = 0 : i64, scratch_operands = 0 : i64, tpu.core_type = #tpu.core_type<tc>, window_params = [{transform_indices = @transform_0, window_bounds = array<i64: 8, 128>}, {pipeline_mode = #tpu.pipeline_mode<synchronous>, transform_indices = @transform_1, window_bounds = array<i64: 128, 128>}, {pipeline_mode = #tpu.pipeline_mode<synchronous>, transform_indices = @transform_2, window_bounds = array<i64: 1, 128>}, {pipeline_mode = #tpu.pipeline_mode<synchronous>, transform_indices = @transform_3, window_bounds = array<i64: 128, 128>}, {pipeline_mode = #tpu.pipeline_mode<synchronous>, transform_indices = @transform_4, window_bounds = array<i64: 1, 128>}, {pipeline_mode = #tpu.pipeline_mode<synchronous>, transform_indices = @transform_5, window_bounds = array<i64: 128, 128>}, {pipeline_mode = #tpu.pipeline_mode<synchronous>, transform_indices = @transform_6, window_bounds = array<i64: 1, 128>}, {transform_indices = @transform_7, window_bounds = array<i64: 8, 128>}]} {
    %c0 = arith.constant 0 : index
    %c0_0 = arith.constant 0 : index
    %0 = vector.load %arg1[%c0, %c0_0] : memref<8x128xf32, #tpu.memory_space<vmem>>, vector<8x128xf32>
    %1 = arith.truncf %0 : vector<8x128xf32> to vector<8x128xbf16>
    %c0_1 = arith.constant 0 : index
    %c0_2 = arith.constant 0 : index
    %2 = vector.load %arg2[%c0_1, %c0_2] : memref<128x128xbf16, #tpu.memory_space<vmem>>, vector<128x128xbf16>
    %cst = arith.constant dense<0.000000e+00> : vector<8x128xf32>
    %3 = tpu.matmul %1, %2, %cst {dimension_numbers = #tpu.dot_dimension_numbers<[1], [0], [0], [1], [0, 0, 1, 1], [], []>} : vector<8x128xbf16>, vector<128x128xbf16>, vector<8x128xf32> -> vector<8x128xf32>
    %c0_3 = arith.constant 0 : index
    %c0_4 = arith.constant 0 : index
    %4 = vector.load %arg3[%c0_3, %c0_4] : memref<1x128xf32, #tpu.memory_space<vmem>>, vector<1x128xf32>
    %5 = vector.broadcast %4 : vector<1x128xf32> to vector<8x128xf32>
    %6 = arith.addf %3, %5 : vector<8x128xf32>
    %cst_5 = arith.constant 0.000000e+00 : f32
    %7 = vector.broadcast %cst_5 : f32 to vector<8x128xf32>
    %8 = arith.maximumf %6, %7 : vector<8x128xf32>
    %9 = arith.truncf %8 : vector<8x128xf32> to vector<8x128xbf16>
    %c0_6 = arith.constant 0 : index
    %c0_7 = arith.constant 0 : index
    %10 = vector.load %arg4[%c0_6, %c0_7] : memref<128x128xbf16, #tpu.memory_space<vmem>>, vector<128x128xbf16>
    %cst_8 = arith.constant dense<0.000000e+00> : vector<8x128xf32>
    %11 = tpu.matmul %9, %10, %cst_8 {dimension_numbers = #tpu.dot_dimension_numbers<[1], [0], [0], [1], [0, 0, 1, 1], [], []>} : vector<8x128xbf16>, vector<128x128xbf16>, vector<8x128xf32> -> vector<8x128xf32>
    %c0_9 = arith.constant 0 : index
    %c0_10 = arith.constant 0 : index
    %12 = vector.load %arg5[%c0_9, %c0_10] : memref<1x128xf32, #tpu.memory_space<vmem>>, vector<1x128xf32>
    %13 = vector.broadcast %12 : vector<1x128xf32> to vector<8x128xf32>
    %14 = arith.addf %11, %13 : vector<8x128xf32>
    %cst_11 = arith.constant 0.000000e+00 : f32
    %15 = vector.broadcast %cst_11 : f32 to vector<8x128xf32>
    %16 = arith.maximumf %14, %15 : vector<8x128xf32>
    %17 = arith.truncf %16 : vector<8x128xf32> to vector<8x128xbf16>
    %c0_12 = arith.constant 0 : index
    %c0_13 = arith.constant 0 : index
    %18 = vector.load %arg6[%c0_12, %c0_13] : memref<128x128xbf16, #tpu.memory_space<vmem>>, vector<128x128xbf16>
    %cst_14 = arith.constant dense<0.000000e+00> : vector<8x128xf32>
    %19 = tpu.matmul %17, %18, %cst_14 {dimension_numbers = #tpu.dot_dimension_numbers<[1], [0], [0], [1], [0, 0, 1, 1], [], []>} : vector<8x128xbf16>, vector<128x128xbf16>, vector<8x128xf32> -> vector<8x128xf32>
    %c0_15 = arith.constant 0 : index
    %c0_16 = arith.constant 0 : index
    %20 = vector.load %arg7[%c0_15, %c0_16] : memref<1x128xf32, #tpu.memory_space<vmem>>, vector<1x128xf32>
    %21 = vector.broadcast %20 : vector<1x128xf32> to vector<8x128xf32>
    %22 = arith.addf %19, %21 : vector<8x128xf32>
    %23 = arith.truncf %22 : vector<8x128xf32> to vector<8x128xbf16>
    %c0_17 = arith.constant 0 : index
    %c0_18 = arith.constant 0 : index
    %24 = vector.load %arg8[%c0_17, %c0_18] : memref<8x128xbf16, #tpu.memory_space<vmem>>, vector<8x128xbf16>
    tpu.vector_store %arg8[%c0_17, %c0_18], %23 {strides = array<i32>} : memref<8x128xbf16, #tpu.memory_space<vmem>>, vector<8x128xbf16>,
    return
  }
  func.func @transform_0(%arg0: i32) -> (i32, i32) {
    %c0_i32 = arith.constant 0 : i32
    %c0_i32_0 = arith.constant 0 : i32
    return %arg0, %c0_i32 : i32, i32
  }
  func.func @transform_1(%arg0: i32) -> (i32, i32) {
    %c0_i32 = arith.constant 0 : i32
    %c0_i32_0 = arith.constant 0 : i32
    %c0_i32_1 = arith.constant 0 : i32
    return %c0_i32, %c0_i32_0 : i32, i32
  }
  func.func @transform_2(%arg0: i32) -> (i32, i32) {
    %c0_i32 = arith.constant 0 : i32
    %c0_i32_0 = arith.constant 0 : i32
    %c0_i32_1 = arith.constant 0 : i32
    return %c0_i32, %c0_i32_0 : i32, i32
  }
  func.func @transform_3(%arg0: i32) -> (i32, i32) {
    %c0_i32 = arith.constant 0 : i32
    %c0_i32_0 = arith.constant 0 : i32
    %c0_i32_1 = arith.constant 0 : i32
    return %c0_i32, %c0_i32_0 : i32, i32
  }
  func.func @transform_4(%arg0: i32) -> (i32, i32) {
    %c0_i32 = arith.constant 0 : i32
    %c0_i32_0 = arith.constant 0 : i32
    %c0_i32_1 = arith.constant 0 : i32
    return %c0_i32, %c0_i32_0 : i32, i32
  }
  func.func @transform_5(%arg0: i32) -> (i32, i32) {
    %c0_i32 = arith.constant 0 : i32
    %c0_i32_0 = arith.constant 0 : i32
    %c0_i32_1 = arith.constant 0 : i32
    return %c0_i32, %c0_i32_0 : i32, i32
  }
  func.func @transform_6(%arg0: i32) -> (i32, i32) {
    %c0_i32 = arith.constant 0 : i32
    %c0_i32_0 = arith.constant 0 : i32
    %c0_i32_1 = arith.constant 0 : i32
    return %c0_i32, %c0_i32_0 : i32, i32
  }
  func.func @transform_7(%arg0: i32) -> (i32, i32) {
    %c0_i32 = arith.constant 0 : i32
    %c0_i32_0 = arith.constant 0 : i32
    return %arg0, %c0_i32 : i32, i32
  }
}

</mosaic_0001>

<llo_original>
// kernel: mlp_forward.1
$region0: #{mlp_forward.1}
  #allocation0 [shape = 'u32[]', space=smem, size = 0x4, offset = 0x4, fixed_abs, tag = 'smem constant byte address 0x4 - core index']
  #allocation1 [shape = 'u32[144,128]{1,0:T(1,128)}', space=vmem, size = 0x12000, scoped, tag = 'internal scratch']
  %s0 = inlined_call_operand.vmem [shape: f32[16,128], index: 0, kind: input, shape index: {}]
  %s1 = inlined_call_operand.hbm [shape: bf16[128,128], index: 1, kind: input, shape index: {}]
  %s2 = inlined_call_operand.vmem [shape: f32[1,128], index: 2, kind: input, shape index: {}]
  %s3 = inlined_call_operand.hbm [shape: bf16[128,128], index: 3, kind: input, shape index: {}]
  %s4 = inlined_call_operand.vmem [shape: f32[1,128], index: 4, kind: input, shape index: {}]
  %s5 = inlined_call_operand.hbm [shape: bf16[128,128], index: 5, kind: input, shape index: {}]
  %s6 = inlined_call_operand.vmem [shape: f32[1,128], index: 6, kind: input, shape index: {}]
  %s7 = inlined_call_operand.vmem [shape: bf16[16,128], index: 7, kind: output, shape index: {}]
  %s8 = sld [smem:[#allocation0]]
  $region73: #{mlp_forward.1} parent=0
    _
  %s10 = ssub.s32 1, %s8
  %s11 = scalar_select 0, %s10, %s8
  $region1: #{mlp_forward.1} parent=0
    #allocation2 [shape = 'u8[32768]{0}', space=vmem, size = 0x8000, scoped, tag = 'input window, operand 1, single buffered']
    #allocation3 [shape = 's32[2]{0}', space=sflag, size = 0x8, scoped, tag = 'scoped memory for mlp_forward.1']
    #allocation4 [shape = 'u8[32768]{0}', space=vmem, size = 0x8000, scoped, tag = 'input window, operand 3, single buffered']
    #allocation5 [shape = 's32[1]{0}', space=sflag, size = 0x4, scoped, tag = 'scoped memory for mlp_forward.1']
    #allocation6 [shape = 'u8[32768]{0}', space=vmem, size = 0x8000, scoped, tag = 'input window, operand 5, single buffered']
    %12 = vsyncpa [#allocation3], 0
    %13 = vsyncpa [#allocation5], 0
    loop: start=0, step=1, limit=4
    $region2: #{mlp_forward.1} parent=1 // loop_pre_header
      _
    $region3: #{mlp_forward.1} parent=1 // loop_header
      %s15 = sphi 0, %s19
      %p16 = scmp.ge.s32.totalorder %s15, 4
      %s25 = sphi 0, %s27
      %s28 = sphi 0, %s25
      %s29 = sphi 0, %s28
      %s45 = sphi 0, %s29
      %s49 = sphi 0, %s49
      %s51 = sphi 0, %s49
      %s52 = sphi 0, %s51
      %s66 = sphi 0, %s52
      %s70 = sphi 0, %s70
      %s72 = sphi 0, %s70
      %s73 = sphi 0, %s72
      %s87 = sphi 0, %s73
      %s91 = sphi 0, %s91
      %s93 = sphi 0, %s91
      %s94 = sphi 0, %s93
      %s108 = sphi 0, %s94
      %s112 = sphi 0, %s112
      %s114 = sphi 0, %s112
      %s115 = sphi 0, %s114
      %s129 = sphi 0, %s115
      %s133 = sphi 0, %s133
      %s135 = sphi 0, %s133
      %s136 = sphi 0, %s135
      %s150 = sphi 0, %s136
      %s154 = sphi 0, %s154
      %s156 = sphi 0, %s154
      %s157 = sphi 0, %s156
      %s171 = sphi 0, %s157
      %s177 = sphi 0, %s179
      %s180 = sphi 0, %s177
      %s181 = sphi 0, %s180
      %s197 = sphi 0, %s181
    $region4: #{mlp_forward.1} parent=1 // loop_header_branch
      %18 = sbr.rel (%p16) target = $region8
    $region5: #{mlp_forward.1} parent=1 // loop_body
      %s20 = ssub.s32 %s15, 1
      %s21 = ssub.s32 %s15, 2
      %s22 = sadd.s32 %s15, 1
      %s23 = ssub.s32 %s15, %s22
      %p24 = scmp.eq.s32.totalorder %s23, 0
      %s26 = sadd.s32 %s25, 1
      %s27 = scalar_select %p24, %s25, %s26
      %p30 = pneg %p24
      %p31 = scmp.eq.s32.totalorder %s15, 1
      %p32 = por %p30, %p31
      %p33 = scmp.ne.s32.totalorder %s25, %s28
      %p34 = scmp.eq.s32.totalorder %s15, 0
      %p35 = por %p33, %p34
      %p36 = scmp.ne.s32.totalorder %s25, %s28
      %p37 = scmp.eq.s32.totalorder %s20, 1
      %p38 = por %p36, %p37
      %p39 = scmp.ne.s32.totalorder %s28, %s29
      %p40 = scmp.eq.s32.totalorder %s20, 0
      %p41 = por %p39, %p40
      %p42 = scmp.ne.s32.totalorder %s28, %s29
      %p43 = scmp.eq.s32.totalorder %s21, 1
      %p44 = por %p42, %p43
      %p46 = scmp.ne.s32.totalorder %s29, %s45
      %p47 = scmp.eq.s32.totalorder %s21, 0
      %p48 = por %p46, %p47
      %s50 = sadd.s32 %s49, 1
      %p53 = scmp.eq.s32.totalorder %s15, 1
      %p54 = scmp.ne.s32.totalorder %s49, %s51
      %p55 = scmp.eq.s32.totalorder %s15, 0
      %p56 = por %p54, %p55
      %p57 = scmp.ne.s32.totalorder %s49, %s51
      %p58 = scmp.eq.s32.totalorder %s20, 1
      %p59 = por %p57, %p58
      %p60 = scmp.ne.s32.totalorder %s51, %s52
      %p61 = scmp.eq.s32.totalorder %s20, 0
      %p62 = por %p60, %p61
      %p63 = scmp.ne.s32.totalorder %s51, %s52
      %p64 = scmp.eq.s32.totalorder %s21, 1
      %p65 = por %p63, %p64
      %p67 = scmp.ne.s32.totalorder %s52, %s66
      %p68 = scmp.eq.s32.totalorder %s21, 0
      %p69 = por %p67, %p68
      %s71 = sadd.s32 %s70, 1
      %p74 = scmp.eq.s32.totalorder %s15, 1
      %p75 = scmp.ne.s32.totalorder %s70, %s72
      %p76 = scmp.eq.s32.totalorder %s15, 0
      %p77 = por %p75, %p76
      %p78 = scmp.ne.s32.totalorder %s70, %s72
      %p79 = scmp.eq.s32.totalorder %s20, 1
      %p80 = por %p78, %p79
      %p81 = scmp.ne.s32.totalorder %s72, %s73
      %p82 = scmp.eq.s32.totalorder %s20, 0
      %p83 = por %p81, %p82
      %p84 = scmp.ne.s32.totalorder %s72, %s73
      %p85 = scmp.eq.s32.totalorder %s21, 1
      %p86 = por %p84, %p85
      %p88 = scmp.ne.s32.totalorder %s73, %s87
      %p89 = scmp.eq.s32.totalorder %s21, 0
      %p90 = por %p88, %p89
      %s92 = sadd.s32 %s91, 1
      %p95 = scmp.eq.s32.totalorder %s15, 1
      %p96 = scmp.ne.s32.totalorder %s91, %s93
      %p97 = scmp.eq.s32.totalorder %s15, 0
      %p98 = por %p96, %p97
      %p99 = scmp.ne.s32.totalorder %s91, %s93
      %p100 = scmp.eq.s32.totalorder %s20, 1
      %p101 = por %p99, %p100
      %p102 = scmp.ne.s32.totalorder %s93, %s94
      %p103 = scmp.eq.s32.totalorder %s20, 0
      %p104 = por %p102, %p103
      %p105 = scmp.ne.s32.totalorder %s93, %s94
      %p106 = scmp.eq.s32.totalorder %s21, 1
      %p107 = por %p105, %p106
      %p109 = scmp.ne.s32.totalorder %s94, %s108
      %p110 = scmp.eq.s32.totalorder %s21, 0
      %p111 = por %p109, %p110
      %s113 = sadd.s32 %s112, 1
      %p116 = scmp.eq.s32.totalorder %s15, 1
      %p117 = scmp.ne.s32.totalorder %s112, %s114
      %p118 = scmp.eq.s32.totalorder %s15, 0
      %p119 = por %p117, %p118
      %p120 = scmp.ne.s32.totalorder %s112, %s114
      %p121 = scmp.eq.s32.totalorder %s20, 1
      %p122 = por %p120, %p121
      %p123 = scmp.ne.s32.totalorder %s114, %s115
      %p124 = scmp.eq.s32.totalorder %s20, 0
      %p125 = por %p123, %p124
      %p126 = scmp.ne.s32.totalorder %s114, %s115
      %p127 = scmp.eq.s32.totalorder %s21, 1
      %p128 = por %p126, %p127
      %p130 = scmp.ne.s32.totalorder %s115, %s129
      %p131 = scmp.eq.s32.totalorder %s21, 0
      %p132 = por %p130, %p131
      %s134 = sadd.s32 %s133, 1
      %p137 = scmp.eq.s32.totalorder %s15, 1
      %p138 = scmp.ne.s32.totalorder %s133, %s135
      %p139 = scmp.eq.s32.totalorder %s15, 0
      %p140 = por %p138, %p139
      %p141 = scmp.ne.s32.totalorder %s133, %s135
      %p142 = scmp.eq.s32.totalorder %s20, 1
      %p143 = por %p141, %p142
      %p144 = scmp.ne.s32.totalorder %s135, %s136
      %p145 = scmp.eq.s32.totalorder %s20, 0
      %p146 = por %p144, %p145
      %p147 = scmp.ne.s32.totalorder %s135, %s136
      %p148 = scmp.eq.s32.totalorder %s21, 1
      %p149 = por %p147, %p148
      %p151 = scmp.ne.s32.totalorder %s136, %s150
      %p152 = scmp.eq.s32.totalorder %s21, 0
      %p153 = por %p151, %p152
      %s155 = sadd.s32 %s154, 1
      %p158 = scmp.eq.s32.totalorder %s15, 1
      %p159 = scmp.ne.s32.totalorder %s154, %s156
      %p160 = scmp.eq.s32.totalorder %s15, 0
      %p161 = por %p159, %p160
      %p162 = scmp.ne.s32.totalorder %s154, %s156
      %p163 = scmp.eq.s32.totalorder %s20, 1
      %p164 = por %p162, %p163
      %p165 = scmp.ne.s32.totalorder %s156, %s157
      %p166 = scmp.eq.s32.totalorder %s20, 0
      %p167 = por %p165, %p166
      %p168 = scmp.ne.s32.totalorder %s156, %s157
      %p169 = scmp.eq.s32.totalorder %s21, 1
      %p170 = por %p168, %p169
      %p172 = scmp.ne.s32.totalorder %s157, %s171
      %p173 = scmp.eq.s32.totalorder %s21, 0
      %p174 = por %p172, %p173
      %s175 = ssub.s32 %s15, %s22
      %p176 = scmp.eq.s32.totalorder %s175, 0
      %s178 = sadd.s32 %s177, 1
      %s179 = scalar_select %p176, %s177, %s178
      %p182 = pneg %p176
      %p183 = scmp.eq.s32.totalorder %s15, 1
      %p184 = por %p182, %p183
      %p185 = scmp.ne.s32.totalorder %s177, %s180
      %p186 = scmp.eq.s32.totalorder %s15, 0
      %p187 = por %p185, %p186
      %p188 = scmp.ne.s32.totalorder %s177, %s180
      %p189 = scmp.eq.s32.totalorder %s20, 1
      %p190 = por %p188, %p189
      %p191 = scmp.ne.s32.totalorder %s180, %s181
      %p192 = scmp.eq.s32.totalorder %s20, 0
      %p193 = por %p191, %p192
      %p194 = scmp.ne.s32.totalorder %s180, %s181
      %p195 = scmp.eq.s32.totalorder %s21, 1
      %p196 = por %p194, %p195
      %p198 = scmp.ne.s32.totalorder %s181, %s197
      %p199 = scmp.eq.s32.totalorder %s21, 0
      %p200 = por %p198, %p199
      %p201 = scmp.le.s32.totalorder 1, %s15
      %p202 = scmp.lt.s32.totalorder %s15, 3
      %p203 = pnand %p201, %p202
      %p204 = pneg %p203
      // Predicated region
      $region9: #{mlp_forward.1} parent=5 // pred_check
        _
      $region10: #{mlp_forward.1} parent=5 // pred_check_branch
        %206 = sbr.rel (%p203) target = $region12
      $region11: #{mlp_forward.1} parent=5 // pred_region
        %s207 = ssub.s32 %s15, 1
        // Predicated region
        $region13: #{mlp_forward.1} parent=11 // pred_check
          %p208 = pneg %p62
        $region14: #{mlp_forward.1} parent=11 // pred_check_branch
          %210 = sbr.rel (%p208) target = $region16
        $region15: #{mlp_forward.1} parent=11 // pred_region
          %s212 = ssub.s32 1024, 1024
          %213 = vsyncadd [#allocation3], %s212
          %s214 = sshll.u32 [#allocation2], 4
          %s215 = int_to_ptr.vmem [resolvable:$true] %s214
          %220 = dma.hbm_to_vmem [thread:$0]  %s1, 1024, %s215, [#allocation3], 64, 64, 4
        $region16: #{mlp_forward.1} parent=11 // pred_fallthru
          _
        // Predicated region
        $region17: #{mlp_forward.1} parent=11 // pred_check
          %p221 = pneg %p83
        $region18: #{mlp_forward.1} parent=11 // pred_check_branch
          %223 = sbr.rel (%p221) target = $region20
        $region19: #{mlp_forward.1} parent=11 // pred_region
          _
        $region20: #{mlp_forward.1} parent=11 // pred_fallthru
          _
        // Predicated region
        $region21: #{mlp_forward.1} parent=11 // pred_check
          %p224 = pneg %p104
        $region22: #{mlp_forward.1} parent=11 // pred_check_branch
          %226 = sbr.rel (%p224) target = $region24
        $region23: #{mlp_forward.1} parent=11 // pred_region
          %s228 = ssub.s32 1024, 1024
          %229 = vsyncadd [#allocation5], %s228
          %s230 = sshll.u32 [#allocation4], 4
          %s231 = int_to_ptr.vmem [resolvable:$true] %s230
          %236 = dma.hbm_to_vmem [thread:$0]  %s3, 1024, %s231, [#allocation5], 64, 64, 4
        $region24: #{mlp_forward.1} parent=11 // pred_fallthru
          _
        // Predicated region
        $region25: #{mlp_forward.1} parent=11 // pred_check
          %p237 = pneg %p125
        $region26: #{mlp_forward.1} parent=11 // pred_check_branch
          %239 = sbr.rel (%p237) target = $region28
        $region27: #{mlp_forward.1} parent=11 // pred_region
          _
        $region28: #{mlp_forward.1} parent=11 // pred_fallthru
          _
        // Predicated region
        $region29: #{mlp_forward.1} parent=11 // pred_check
          %p240 = pneg %p146
        $region30: #{mlp_forward.1} parent=11 // pred_check_branch
          %242 = sbr.rel (%p240) target = $region32
        $region31: #{mlp_forward.1} parent=11 // pred_region
          %s244 = ssub.s32 1024, 1024
          %245 = vsyncadd [#allocation5], %s244
          %s246 = sshll.u32 [#allocation6], 4
          %s247 = int_to_ptr.vmem [resolvable:$true] %s246
          %252 = dma.hbm_to_vmem [thread:$0]  %s5, 1024, %s247, [#allocation5], 64, 64, 4
        $region32: #{mlp_forward.1} parent=11 // pred_fallthru
          _
        // Predicated region
        $region33: #{mlp_forward.1} parent=11 // pred_check
          %p253 = pneg %p167
        $region34: #{mlp_forward.1} parent=11 // pred_check_branch
          %255 = sbr.rel (%p253) target = $region36
        $region35: #{mlp_forward.1} parent=11 // pred_region
          _
        $region36: #{mlp_forward.1} parent=11 // pred_fallthru
          _
      $region12: #{mlp_forward.1} parent=5 // pred_fallthru
        _
      %p256 = scmp.lt.s32.totalorder %s15, 2
      // Predicated region
      $region37: #{mlp_forward.1} parent=5 // pred_check
        %p257 = pneg %p256
      $region38: #{mlp_forward.1} parent=5 // pred_check_branch
        %259 = sbr.rel (%p257) target = $region40
      $region39: #{mlp_forward.1} parent=5 // pred_region
        // Predicated region
        $region41: #{mlp_forward.1} parent=39 // pred_check
          %p260 = pneg %p35
        $region42: #{mlp_forward.1} parent=39 // pred_check_branch
          %262 = sbr.rel (%p260) target = $region44
        $region43: #{mlp_forward.1} parent=39 // pred_region
          %p263 = scmp.lt.s32.totalorder %s15, 1
          %s264 = scalar_select %p263, %s15, 1
          %s265 = smul.addr %s264, 8
          %s266 = scalar_lea.vmem %s0, %s265
        $region44: #{mlp_forward.1} parent=39 // pred_fallthru
          _
      $region40: #{mlp_forward.1} parent=5 // pred_fallthru
        _
      %p267 = scmp.le.s32.totalorder 1, %s15
      %p268 = scmp.lt.s32.totalorder %s15, 3
      %p269 = pnand %p267, %p268
      %p270 = pneg %p269
      // Predicated region
      $region45: #{mlp_forward.1} parent=5 // pred_check
        _
      $region46: #{mlp_forward.1} parent=5 // pred_check_branch
        %272 = sbr.rel (%p269) target = $region48
      $region47: #{mlp_forward.1} parent=5 // pred_region
        %s273 = ssub.s32 %s15, 1
        // Predicated region
        $region49: #{mlp_forward.1} parent=47 // pred_check
          %p274 = pneg %p62
        $region50: #{mlp_forward.1} parent=47 // pred_check_branch
          %276 = sbr.rel (%p274) target = $region52
        $region51: #{mlp_forward.1} parent=47 // pred_region
          %277 = dma.done [#allocation3], 1024
        $region52: #{mlp_forward.1} parent=47 // pred_fallthru
          _
        // Predicated region
        $region53: #{mlp_forward.1} parent=47 // pred_check
          %p278 = pneg %p104
        $region54: #{mlp_forward.1} parent=47 // pred_check_branch
          %280 = sbr.rel (%p278) target = $region56
        $region55: #{mlp_forward.1} parent=47 // pred_region
          %281 = dma.done [#allocation5], 1024
        $region56: #{mlp_forward.1} parent=47 // pred_fallthru
          _
        // Predicated region
        $region57: #{mlp_forward.1} parent=47 // pred_check
          %p282 = pneg %p146
        $region58: #{mlp_forward.1} parent=47 // pred_check_branch
          %284 = sbr.rel (%p282) target = $region60
        $region59: #{mlp_forward.1} parent=47 // pred_region
          %285 = dma.done [#allocation5], 1024
        $region60: #{mlp_forward.1} parent=47 // pred_fallthru
          _
        %p286 = scmp.lt.s32.totalorder %s20, 1
        %s287 = scalar_select %p286, %s20, 1
        %s288 = smul.addr %s287, 8
        %s289 = scalar_lea.vmem %s0, %s288
        %p290 = pneg %p41
        %p291 = pneg %p38
        %p292 = pneg %p62
        %p293 = pneg %p59
        %p294 = pneg %p83
        %p295 = pneg %p80
        %p296 = pneg %p104
        %p297 = pneg %p101
        %p298 = pneg %p125
        %p299 = pneg %p122
        %p300 = pneg %p146
        %p301 = pneg %p143
        %p302 = pneg %p167
        %p303 = pneg %p164
        %p304 = pneg %p193
        %p305 = pneg %p190
        %p306 = scmp.lt.s32.totalorder %s20, 1
        %s307 = scalar_select %p306, %s20, 1
        %s308 = smul.addr %s307, 4
        %s309 = scalar_lea.vmem %s7, %s308
        %p310 = scmp.lt.s32.totalorder %s20, 1
        %s311 = scalar_select %p310, %s20, 1
        %s312 = smul.addr %s311, 8
        %s313 = scalar_lea.vmem %s0, %s312
        %p314 = scmp.lt.s32.totalorder %s20, 1
        %s315 = scalar_select %p314, %s20, 1
        %s316 = smul.addr %s315, 4
        %s317 = scalar_lea.vmem %s7, %s316
        %v319 = vld [vmem:[%s313] sm:$0xff]
        %v320 = vpack.c.bf16 %v319, %v319
        %v321 = vld [vmem:[#allocation2] sm:$0xf]
        %v322 = vld [vmem:[#allocation2 + $0x4] sm:$0xf]
        %v323 = vld [vmem:[#allocation2 + $0x8] sm:$0xf]
        %v324 = vld [vmem:[#allocation2 + $0xc] sm:$0xf]
        %v325 = vld [vmem:[#allocation2 + $0x10] sm:$0xf]
        %v326 = vld [vmem:[#allocation2 + $0x14] sm:$0xf]
        %v327 = vld [vmem:[#allocation2 + $0x18] sm:$0xf]
        %v328 = vld [vmem:[#allocation2 + $0x1c] sm:$0xf]
        %v329 = vld [vmem:[#allocation2 + $0x20] sm:$0xf]
        %v330 = vld [vmem:[#allocation2 + $0x24] sm:$0xf]
        %v331 = vld [vmem:[#allocation2 + $0x28] sm:$0xf]
        %v332 = vld [vmem:[#allocation2 + $0x2c] sm:$0xf]
        %v333 = vld [vmem:[#allocation2 + $0x30] sm:$0xf]
        %v334 = vld [vmem:[#allocation2 + $0x34] sm:$0xf]
        %v335 = vld [vmem:[#allocation2 + $0x38] sm:$0xf]
        %v336 = vld [vmem:[#allocation2 + $0x3c] sm:$0xf]
        %v337 = vld [vmem:[%s2] sm:$0x1]
        %v339 = vlaneseq
        %v340 = vshrl.u32 %v339, 7
        %v341 = vsub.s32 0, %v340
        %v342 = vrot.slane %v337, %v341
        %v360 = vunpack.c.l.b16 %v321
        %v361 = vunpack.c.l.b16 %v322
        %v362 = vunpack.c.l.b16 %v323
        %v363 = vunpack.c.l.b16 %v324
        %v364 = vunpack.c.l.b16 %v325
        %v365 = vunpack.c.l.b16 %v326
        %v366 = vunpack.c.l.b16 %v327
        %v367 = vunpack.c.l.b16 %v328
        %v368 = vunpack.c.l.b16 %v329
        %v369 = vunpack.c.l.b16 %v330
        %v370 = vunpack.c.l.b16 %v331
        %v371 = vunpack.c.l.b16 %v332
        %v372 = vunpack.c.l.b16 %v333
        %v373 = vunpack.c.l.b16 %v334
        %v374 = vunpack.c.l.b16 %v335
        %v375 = vunpack.c.l.b16 %v336
        %v376 = vpack.c.b16 %v361, %v360
        %v377 = vpack.c.b16 %v363, %v362
        %v378 = vpack.c.b16 %v365, %v364
        %v379 = vpack.c.b16 %v367, %v366
        %v380 = vpack.c.b16 %v369, %v368
        %v381 = vpack.c.b16 %v371, %v370
        %v382 = vpack.c.b16 %v373, %v372
        %v383 = vpack.c.b16 %v375, %v374
        %392 = vmatprep.subr.bf16.mxu0 0
        %393 = vmatpush1.bf16.msra.mxu0 %v376
        %394 = vmatprep.subr.bf16.mxu0 0
        %395 = vmatpush1.bf16.msra.mxu0 %v377
        %396 = vmatprep.subr.bf16.mxu0 0
        %397 = vmatpush1.bf16.msra.mxu0 %v378
        %398 = vmatprep.subr.bf16.mxu0 0
        %399 = vmatpush1.bf16.msra.mxu0 %v379
        %400 = vmatprep.subr.bf16.mxu0 0
        %401 = vmatpush1.bf16.msra.mxu0 %v380
        %402 = vmatprep.subr.bf16.mxu0 0
        %403 = vmatpush1.bf16.msra.mxu0 %v381
        %404 = vmatprep.subr.bf16.mxu0 0
        %405 = vmatpush1.bf16.msra.mxu0 %v382
        %406 = vmatprep.subr.bf16.mxu0 0
        %407 = vmatpush1.bf16.msra.mxu0 %v383
        %408 = vmatprep.subr.bf16.mxu0 0
        %409 = vmatpush1.bf16.msra.mxu0 0
        %410 = vmatprep.subr.bf16.mxu0 0
        %411 = vmatpush1.bf16.msra.mxu0 0
        %412 = vmatprep.subr.bf16.mxu0 0
        %413 = vmatpush1.bf16.msra.mxu0 0
        %414 = vmatprep.subr.bf16.mxu0 0
        %415 = vmatpush1.bf16.msra.mxu0 0
        %416 = vmatprep.subr.bf16.mxu0 0
        %417 = vmatpush1.bf16.msra.mxu0 0
        %418 = vmatprep.subr.bf16.mxu0 0
        %419 = vmatpush1.bf16.msra.mxu0 0
        %420 = vmatprep.subr.bf16.mxu0 0
        %421 = vmatpush1.bf16.msra.mxu0 0
        %422 = vmatprep.subr.bf16.mxu0 0
        %423 = vmatpush1.bf16.msra.mxu0 0
        %424 = vmatprep.mubr.bf16.mxu0 0
        %425 = vmatmul.mubr.bf16.gmra.mrb[0].mxu0 %v320
        %v426 = vpop.f32.mrb[0].mxu0
        %v427 = vadd.f32 %v342, %v426
        %v428 = vpop.f32.mrb[0].mxu0
        %v429 = vpop.f32.mrb[0].mxu0
        %v430 = vpop.f32.mrb[0].mxu0
        %431 = vdwg.mxu0
        %v432 = vmax.f32 %v427, 0.0
        %v433 = vpack.c.bf16 %v432, %v432
        %v434 = vld [vmem:[#allocation4] sm:$0xf]
        %v435 = vld [vmem:[#allocation4 + $0x4] sm:$0xf]
        %v436 = vld [vmem:[#allocation4 + $0x8] sm:$0xf]
        %v437 = vld [vmem:[#allocation4 + $0xc] sm:$0xf]
        %v438 = vld [vmem:[#allocation4 + $0x10] sm:$0xf]
        %v439 = vld [vmem:[#allocation4 + $0x14] sm:$0xf]
        %v440 = vld [vmem:[#allocation4 + $0x18] sm:$0xf]
        %v441 = vld [vmem:[#allocation4 + $0x1c] sm:$0xf]
        %v442 = vld [vmem:[#allocation4 + $0x20] sm:$0xf]
        %v443 = vld [vmem:[#allocation4 + $0x24] sm:$0xf]
        %v444 = vld [vmem:[#allocation4 + $0x28] sm:$0xf]
        %v445 = vld [vmem:[#allocation4 + $0x2c] sm:$0xf]
        %v446 = vld [vmem:[#allocation4 + $0x30] sm:$0xf]
        %v447 = vld [vmem:[#allocation4 + $0x34] sm:$0xf]
        %v448 = vld [vmem:[#allocation4 + $0x38] sm:$0xf]
        %v449 = vld [vmem:[#allocation4 + $0x3c] sm:$0xf]
        %v450 = vld [vmem:[%s4] sm:$0x1]
        %v452 = vlaneseq
        %v453 = vshrl.u32 %v452, 7
        %v454 = vsub.s32 0, %v453
        %v455 = vrot.slane %v450, %v454
        %v473 = vunpack.c.l.b16 %v434
        %v474 = vunpack.c.l.b16 %v435
        %v475 = vunpack.c.l.b16 %v436
        %v476 = vunpack.c.l.b16 %v437
        %v477 = vunpack.c.l.b16 %v438
        %v478 = vunpack.c.l.b16 %v439
        %v479 = vunpack.c.l.b16 %v440
        %v480 = vunpack.c.l.b16 %v441
        %v481 = vunpack.c.l.b16 %v442
        %v482 = vunpack.c.l.b16 %v443
        %v483 = vunpack.c.l.b16 %v444
        %v484 = vunpack.c.l.b16 %v445
        %v485 = vunpack.c.l.b16 %v446
        %v486 = vunpack.c.l.b16 %v447
        %v487 = vunpack.c.l.b16 %v448
        %v488 = vunpack.c.l.b16 %v449
        %v489 = vpack.c.b16 %v474, %v473
        %v490 = vpack.c.b16 %v476, %v475
        %v491 = vpack.c.b16 %v478, %v477
        %v492 = vpack.c.b16 %v480, %v479
        %v493 = vpack.c.b16 %v482, %v481
        %v494 = vpack.c.b16 %v484, %v483
        %v495 = vpack.c.b16 %v486, %v485
        %v496 = vpack.c.b16 %v488, %v487
        %505 = vmatprep.subr.bf16.mxu0 0
        %506 = vmatpush1.bf16.msra.mxu0 %v489
        %507 = vmatprep.subr.bf16.mxu0 0
        %508 = vmatpush1.bf16.msra.mxu0 %v490
        %509 = vmatprep.subr.bf16.mxu0 0
        %510 = vmatpush1.bf16.msra.mxu0 %v491
        %511 = vmatprep.subr.bf16.mxu0 0
        %512 = vmatpush1.bf16.msra.mxu0 %v492
        %513 = vmatprep.subr.bf16.mxu0 0
        %514 = vmatpush1.bf16.msra.mxu0 %v493
        %515 = vmatprep.subr.bf16.mxu0 0
        %516 = vmatpush1.bf16.msra.mxu0 %v494
        %517 = vmatprep.subr.bf16.mxu0 0
        %518 = vmatpush1.bf16.msra.mxu0 %v495
        %519 = vmatprep.subr.bf16.mxu0 0
        %520 = vmatpush1.bf16.msra.mxu0 %v496
        %521 = vmatprep.subr.bf16.mxu0 0
        %522 = vmatpush1.bf16.msra.mxu0 0
        %523 = vmatprep.subr.bf16.mxu0 0
        %524 = vmatpush1.bf16.msra.mxu0 0
        %525 = vmatprep.subr.bf16.mxu0 0
        %526 = vmatpush1.bf16.msra.mxu0 0
        %527 = vmatprep.subr.bf16.mxu0 0
        %528 = vmatpush1.bf16.msra.mxu0 0
        %529 = vmatprep.subr.bf16.mxu0 0
        %530 = vmatpush1.bf16.msra.mxu0 0
        %531 = vmatprep.subr.bf16.mxu0 0
        %532 = vmatpush1.bf16.msra.mxu0 0
        %533 = vmatprep.subr.bf16.mxu0 0
        %534 = vmatpush1.bf16.msra.mxu0 0
        %535 = vmatprep.subr.bf16.mxu0 0
        %536 = vmatpush1.bf16.msra.mxu0 0
        %537 = vmatprep.mubr.bf16.mxu0 0
        %538 = vmatmul.mubr.bf16.gmra.mrb[0].mxu0 %v433
        %v539 = vpop.f32.mrb[0].mxu0
        %v540 = vadd.f32 %v455, %v539
        %v541 = vpop.f32.mrb[0].mxu0
        %v542 = vpop.f32.mrb[0].mxu0
        %v543 = vpop.f32.mrb[0].mxu0
        %544 = vdwg.mxu0
        %v545 = vmax.f32 %v540, 0.0
        %v546 = vpack.c.bf16 %v545, %v545
        %v547 = vld [vmem:[#allocation6] sm:$0xf]
        %v548 = vld [vmem:[#allocation6 + $0x4] sm:$0xf]
        %v549 = vld [vmem:[#allocation6 + $0x8] sm:$0xf]
        %v550 = vld [vmem:[#allocation6 + $0xc] sm:$0xf]
        %v551 = vld [vmem:[#allocation6 + $0x10] sm:$0xf]
        %v552 = vld [vmem:[#allocation6 + $0x14] sm:$0xf]
        %v553 = vld [vmem:[#allocation6 + $0x18] sm:$0xf]
        %v554 = vld [vmem:[#allocation6 + $0x1c] sm:$0xf]
        %v555 = vld [vmem:[#allocation6 + $0x20] sm:$0xf]
        %v556 = vld [vmem:[#allocation6 + $0x24] sm:$0xf]
        %v557 = vld [vmem:[#allocation6 + $0x28] sm:$0xf]
        %v558 = vld [vmem:[#allocation6 + $0x2c] sm:$0xf]
        %v559 = vld [vmem:[#allocation6 + $0x30] sm:$0xf]
        %v560 = vld [vmem:[#allocation6 + $0x34] sm:$0xf]
        %v561 = vld [vmem:[#allocation6 + $0x38] sm:$0xf]
        %v562 = vld [vmem:[#allocation6 + $0x3c] sm:$0xf]
        %v563 = vld [vmem:[%s6] sm:$0x1]
        %v565 = vlaneseq
        %v566 = vshrl.u32 %v565, 7
        %v567 = vsub.s32 0, %v566
        %v568 = vrot.slane %v563, %v567
        %v586 = vunpack.c.l.b16 %v547
        %v587 = vunpack.c.l.b16 %v548
        %v588 = vunpack.c.l.b16 %v549
        %v589 = vunpack.c.l.b16 %v550
        %v590 = vunpack.c.l.b16 %v551
        %v591 = vunpack.c.l.b16 %v552
        %v592 = vunpack.c.l.b16 %v553
        %v593 = vunpack.c.l.b16 %v554
        %v594 = vunpack.c.l.b16 %v555
        %v595 = vunpack.c.l.b16 %v556
        %v596 = vunpack.c.l.b16 %v557
        %v597 = vunpack.c.l.b16 %v558
        %v598 = vunpack.c.l.b16 %v559
        %v599 = vunpack.c.l.b16 %v560
        %v600 = vunpack.c.l.b16 %v561
        %v601 = vunpack.c.l.b16 %v562
        %v602 = vpack.c.b16 %v587, %v586
        %v603 = vpack.c.b16 %v589, %v588
        %v604 = vpack.c.b16 %v591, %v590
        %v605 = vpack.c.b16 %v593, %v592
        %v606 = vpack.c.b16 %v595, %v594
        %v607 = vpack.c.b16 %v597, %v596
        %v608 = vpack.c.b16 %v599, %v598
        %v609 = vpack.c.b16 %v601, %v600
        %618 = vmatprep.subr.bf16.mxu0 0
        %619 = vmatpush1.bf16.msra.mxu0 %v602
        %620 = vmatprep.subr.bf16.mxu0 0
        %621 = vmatpush1.bf16.msra.mxu0 %v603
        %622 = vmatprep.subr.bf16.mxu0 0
        %623 = vmatpush1.bf16.msra.mxu0 %v604
        %624 = vmatprep.subr.bf16.mxu0 0
        %625 = vmatpush1.bf16.msra.mxu0 %v605
        %626 = vmatprep.subr.bf16.mxu0 0
        %627 = vmatpush1.bf16.msra.mxu0 %v606
        %628 = vmatprep.subr.bf16.mxu0 0
        %629 = vmatpush1.bf16.msra.mxu0 %v607
        %630 = vmatprep.subr.bf16.mxu0 0
        %631 = vmatpush1.bf16.msra.mxu0 %v608
        %632 = vmatprep.subr.bf16.mxu0 0
        %633 = vmatpush1.bf16.msra.mxu0 %v609
        %634 = vmatprep.subr.bf16.mxu0 0
        %635 = vmatpush1.bf16.msra.mxu0 0
        %636 = vmatprep.subr.bf16.mxu0 0
        %637 = vmatpush1.bf16.msra.mxu0 0
        %638 = vmatprep.subr.bf16.mxu0 0
        %639 = vmatpush1.bf16.msra.mxu0 0
        %640 = vmatprep.subr.bf16.mxu0 0
        %641 = vmatpush1.bf16.msra.mxu0 0
        %642 = vmatprep.subr.bf16.mxu0 0
        %643 = vmatpush1.bf16.msra.mxu0 0
        %644 = vmatprep.subr.bf16.mxu0 0
        %645 = vmatpush1.bf16.msra.mxu0 0
        %646 = vmatprep.subr.bf16.mxu0 0
        %647 = vmatpush1.bf16.msra.mxu0 0
        %648 = vmatprep.subr.bf16.mxu0 0
        %649 = vmatpush1.bf16.msra.mxu0 0
        %650 = vmatprep.mubr.bf16.mxu0 0
        %651 = vmatmul.mubr.bf16.gmra.mrb[0].mxu0 %v546
        %v652 = vpop.f32.mrb[0].mxu0
        %v653 = vadd.f32 %v568, %v652
        %v654 = vpop.f32.mrb[0].mxu0
        %v655 = vpop.f32.mrb[0].mxu0
        %v656 = vpop.f32.mrb[0].mxu0
        %657 = vdwg.mxu0
        %v658 = vpack.c.bf16 %v653, %v653
        %659 = vst [vmem:[%s317] sm:$0xf] %v658
        %p660 = scmp.lt.s32.totalorder %s20, 1
        %s661 = scalar_select %p660, %s20, 1
        %s662 = smul.addr %s661, 4
        %s663 = scalar_lea.vmem %s7, %s662
        // Predicated region
        $region61: #{mlp_forward.1} parent=47 // pred_check
          %p664 = pneg %p190
        $region62: #{mlp_forward.1} parent=47 // pred_check_branch
          %666 = sbr.rel (%p664) target = $region64
        $region63: #{mlp_forward.1} parent=47 // pred_region
          _
        $region64: #{mlp_forward.1} parent=47 // pred_fallthru
          _
      $region48: #{mlp_forward.1} parent=5 // pred_fallthru
        _
      %p667 = scmp.le.s32.totalorder 2, %s15
      // Predicated region
      $region65: #{mlp_forward.1} parent=5 // pred_check
        %p668 = pneg %p667
      $region66: #{mlp_forward.1} parent=5 // pred_check_branch
        %670 = sbr.rel (%p668) target = $region68
      $region67: #{mlp_forward.1} parent=5 // pred_region
        %s671 = ssub.s32 %s15, 2
        // Predicated region
        $region69: #{mlp_forward.1} parent=67 // pred_check
          %p672 = pneg %p196
        $region70: #{mlp_forward.1} parent=67 // pred_check_branch
          %674 = sbr.rel (%p672) target = $region72
        $region71: #{mlp_forward.1} parent=67 // pred_region
          %p675 = scmp.lt.s32.totalorder %s21, 1
          %s676 = scalar_select %p675, %s21, 1
          %s677 = smul.addr %s676, 4
          %s678 = scalar_lea.vmem %s7, %s677
        $region72: #{mlp_forward.1} parent=67 // pred_fallthru
          _
      $region68: #{mlp_forward.1} parent=5 // pred_fallthru
        _
    $region6: #{mlp_forward.1} parent=1 // loop_footer
      %s19 = sadd.s32 1, %s15
    $region7: #{mlp_forward.1} parent=1 // loop_footer_branch
      %14 = sbr.rel target = $region3
    $region8: #{mlp_forward.1} parent=1 // loop_exit
      _
    %679 = vsyncpa [#allocation3], 1
    %s680 = scalar_lea.sflag [#allocation3], 1
    %681 = vsyncpa %s680, 1
    %682 = vsyncpa [#allocation5], 1

</llo_original>
